<compile_context>
chip_gen: v7x
topology: tpu7x:2x2x1
jax: 0.10.0
libtpu: 0.0.40
codegen_flags: <defaults>
</compile_context>

<pallas_src>
import functools

import jax
import jax.numpy as jnp
from jax.experimental import pallas as pl
from jax.experimental.pallas import tpu as pltpu

# TODO(synk): the HuggingFace RoBERTa encoder (self.encoder) has no clean
# single-kernel Pallas equivalent; its output `features` (last_hidden_state)
# is taken as the wrapper input instead.


def _head_kernel(cls_ref, w1_ref, b1_ref, w2_ref, b2_ref, w3_ref, b3_ref,
                 prob_ref):
    # cls_ref: [tb, H] bf16 CLS rows; w1/w2: [H, H] bf16; b1/b2: [1, H] f32
    # w3_ref: [1, H] f32 (out_proj column as a row); b3_ref: [1, 1] f32
    x = cls_ref[...]                       # already bf16 (cast fused in wrapper)

    # dropout (inference) -> identity
    # dense1 + ReLU  (bf16 MXU, f32 accumulate)
    h = jnp.dot(x, w1_ref[...], preferred_element_type=jnp.float32) + b1_ref[...]
    h = jnp.maximum(h, 0.0)

    # dense2 + ReLU
    h = jnp.dot(h.astype(jnp.bfloat16), w2_ref[...],
                preferred_element_type=jnp.float32) + b2_ref[...]
    h = jnp.maximum(h, 0.0)

    # dropout (inference) -> identity
    # out_proj: N=1 matmul would waste the MXU -> VPU multiply + lane reduce.
    logits = jnp.sum(h * w3_ref[...], axis=-1, keepdims=True) + b3_ref[...]

    # sigmoid
    prob_ref[...] = jax.nn.sigmoid(logits)


def _round_up(a, b):
    return pl.cdiv(a, b) * b


def _default_block_b():
    """Per-generation batch-tile cap (v5e: 16 MiB scoped VMEM, v6e: 32 MiB)."""
    try:
        kind = jax.devices()[0].device_kind.lower()
    except Exception:
        return 512
    if "v5 lite" in kind or "v5e" in kind or "v5litepod" in kind:
        return 256
    if "v6" in kind or "trillium" in kind:
        return 1024
    return 512


def _choose_tb(B, block_b):
    """Pick the batch tile.

    Batches that cannot be split on the bf16 (16,128) sublane granule — or are
    too small to bother tiling — are one full block (block == full dim, so no
    tiling constraint applies).  Otherwise use 256-row MXU-aligned tiles sized
    so there are at least 2 grid steps (lets v7x shard the 'parallel' batch
    axis across its two TensorCores), capped at block_b.
    """
    if B % 16 != 0 or B <= 256:
        return B
    tb = min(block_b, _round_up(pl.cdiv(B, 2), 256))
    return min(max(tb, 16), B)


@functools.partial(jax.jit, static_argnames=("block_b", "single_buffer_weights"))
def _model_forward_impl(features, w1, b1, w2, b2, w3, b3, *, block_b,
                        single_buffer_weights):
    B, S, H = features.shape
    f32, bf16 = jnp.float32, jnp.bfloat16

    # CLS extraction is a plain XLA slice: it IS the cls_feature output, and it
    # keeps the kernel from ever touching the full [B, S, H] tensor.  The bf16
    # cast of the kernel input fuses into the same slice (halves input DMA).
    cls_feature = features[:, 0, :].astype(f32)            # [B, H] (returned)
    cls_in = cls_feature.astype(bf16)                       # [B, H] kernel input

    tb = _choose_tb(B, block_b)
    n_blocks = pl.cdiv(B, tb)

    if single_buffer_weights:
        # Constant index_map => the second pipeline buffer is dead VMEM.
        def const_spec(shape):
            return pl.BlockSpec(shape, lambda i: (0,) * len(shape),
                                pipeline_mode=pl.Buffered(1))
    else:
        def const_spec(shape):
            return pl.BlockSpec(shape, lambda i: (0,) * len(shape))

    prob = pl.pallas_call(
        _head_kernel,
        grid=(n_blocks,),
        in_specs=[
            pl.BlockSpec((tb, H), lambda i: (i, 0)),   # CLS rows (bf16), tiled over B
            const_spec((H, H)),                        # w1 (bf16), VMEM-resident
            const_spec((1, H)),                        # b1 (f32)
            const_spec((H, H)),                        # w2 (bf16)
            const_spec((1, H)),                        # b2 (f32)
            const_spec((1, H)),                        # w3 as a row (f32)
            const_spec((1, 1)),                        # b3 (f32)
        ],
        # Ragged last block: rows past B are simply never written, so no input
        # padding pass and no output slice are needed.
        out_specs=pl.BlockSpec((tb, 1), lambda i: (i, 0)),
        out_shape=jax.ShapeDtypeStruct((B, 1), f32),
        compiler_params=pltpu.CompilerParams(
            dimension_semantics=("parallel",),
        ),
    )(
        cls_in,
        w1.astype(bf16), b1.reshape(1, H).astype(f32),
        w2.astype(bf16), b2.reshape(1, H).astype(f32),
        w3.reshape(1, H).astype(f32), b3.reshape(1, 1).astype(f32),
    )
    return prob, cls_feature


def model_forward(features, w1, b1, w2, b2, w3, b3, block_b=None):
    """Pallas implementation of Model.forward (labels=None path).

    features: [B, S, H] float32 (encoder last hidden state)
    w1, w2:   [H, H]  (already transposed to (in, out) layout)
    b1, b2:   [H]
    w3:       [H, 1]
    b3:       [1]
    Returns (prob [B,1] f32, cls_feature [B,H] f32).
    """
    if block_b is None:
        block_b = _default_block_b()
    try:
        return _model_forward_impl(features, w1, b1, w2, b2, w3, b3,
                                   block_b=block_b, single_buffer_weights=True)
    except Exception:
        # Fallback if this JAX build rejects single-buffered (Buffered(1)) specs.
        return _model_forward_impl(features, w1, b1, w2, b2, w3, b3,
                                   block_b=block_b, single_buffer_weights=False)


def _reference(features, w1, b1, w2, b2, w3, b3):
    """Pure-JAX reference with the same bf16 storage / f32 accumulation."""
    cls = features[:, 0, :]
    xb = cls.astype(jnp.bfloat16)
    h = jnp.dot(xb, w1.astype(jnp.bfloat16),
                preferred_element_type=jnp.float32) + b1
    h = jnp.maximum(h, 0.0)
    h = jnp.dot(h.astype(jnp.bfloat16), w2.astype(jnp.bfloat16),
                preferred_element_type=jnp.float32) + b2
    h = jnp.maximum(h, 0.0)
    logits = h @ w3 + b3
    return jax.nn.sigmoid(logits), cls


def _make_params(key, H):
    k_w1, k_b1, k_w2, k_b2, k_w3, k_b3 = jax.random.split(key, 6)
    bound = 1.0 / jnp.sqrt(jnp.float32(H))
    w1 = jax.random.uniform(k_w1, (H, H), jnp.float32, -bound, bound)
    b1 = jax.random.uniform(k_b1, (H,), jnp.float32, -bound, bound)
    w2 = jax.random.uniform(k_w2, (H, H), jnp.float32, -bound, bound)
    b2 = jax.random.uniform(k_b2, (H,), jnp.float32, -bound, bound)
    w3 = jax.random.uniform(k_w3, (H, 1), jnp.float32, -bound, bound)
    b3 = jax.random.uniform(k_b3, (1,), jnp.float32, -bound, bound)
    return w1, b1, w2, b2, w3, b3


def _run_and_check(B, S, H, key):
    k_feat, k_par = jax.random.split(key)
    features = jax.random.normal(k_feat, (B, S, H), dtype=jnp.float32)
    params = _make_params(k_par, H)

    prob, cls_feature = model_forward(features, *params)
    jax.block_until_ready((prob, cls_feature))

    prob_ref, cls_ref = _reference(features, *params)
    assert prob.shape == (B, 1) and cls_feature.shape == (B, H)
    assert jnp.allclose(prob, prob_ref, atol=2e-3), f"prob mismatch (B={B},H={H})"
    assert jnp.allclose(cls_feature, cls_ref, atol=1e-6), "cls_feature mismatch"


if __name__ == "__main__":
    key = jax.random.PRNGKey(0)
    k_small, k_big = jax.random.split(key)

    # Small shapes consistent with the module: batch=2, seq=8, hidden=32.
    _run_and_check(B=2, S=8, H=32, key=k_small)

    # Larger shape to exercise the tiled / ragged grid path (multiple of the
    # (16,128) bf16 tile along H, >=2 grid steps, ragged last batch block).
    _run_and_check(B=544, S=4, H=256, key=k_big)

    print("KERNEL_OK")
</pallas_src>

<mosaic_0001>
module attributes {stable_mosaic.version = 11 : i64} {
  func.func @_head_kernel(%arg0: i32, %arg1: memref<2x32xbf16, #tpu.memory_space<vmem>>, %arg2: memref<32x32xbf16, #tpu.memory_space<vmem>>, %arg3: memref<1x32xf32, #tpu.memory_space<vmem>>, %arg4: memref<32x32xbf16, #tpu.memory_space<vmem>>, %arg5: memref<1x32xf32, #tpu.memory_space<vmem>>, %arg6: memref<1x32xf32, #tpu.memory_space<vmem>>, %arg7: memref<1x1xf32, #tpu.memory_space<vmem>>, %arg8: memref<2x1xf32, #tpu.memory_space<vmem>>) attributes {dimension_semantics = [#tpu.dimension_semantics<parallel>], iteration_bounds = array<i64: 1>, scalar_prefetch = 0 : i64, scratch_operands = 0 : i64, tpu.core_type = #tpu.core_type<tc>, window_params = [{transform_indices = @transform_0, window_bounds = array<i64: 2, 32>}, {pipeline_mode = #tpu.pipeline_mode<synchronous>, transform_indices = @transform_1, window_bounds = array<i64: 32, 32>}, {pipeline_mode = #tpu.pipeline_mode<synchronous>, transform_indices = @transform_2, window_bounds = array<i64: 1, 32>}, {pipeline_mode = #tpu.pipeline_mode<synchronous>, transform_indices = @transform_3, window_bounds = array<i64: 32, 32>}, {pipeline_mode = #tpu.pipeline_mode<synchronous>, transform_indices = @transform_4, window_bounds = array<i64: 1, 32>}, {pipeline_mode = #tpu.pipeline_mode<synchronous>, transform_indices = @transform_5, window_bounds = array<i64: 1, 32>}, {pipeline_mode = #tpu.pipeline_mode<synchronous>, transform_indices = @transform_6, window_bounds = array<i64: 1, 1>}, {transform_indices = @transform_7, window_bounds = array<i64: 2, 1>}]} {
    %c0 = arith.constant 0 : index
    %c0_0 = arith.constant 0 : index
    %0 = vector.load %arg1[%c0, %c0_0] : memref<2x32xbf16, #tpu.memory_space<vmem>>, vector<2x32xbf16>
    %c0_1 = arith.constant 0 : index
    %c0_2 = arith.constant 0 : index
    %1 = vector.load %arg2[%c0_1, %c0_2] : memref<32x32xbf16, #tpu.memory_space<vmem>>, vector<32x32xbf16>
    %cst = arith.constant dense<0.000000e+00> : vector<2x32xf32>
    %2 = tpu.matmul %0, %1, %cst {dimension_numbers = #tpu.dot_dimension_numbers<[1], [0], [0], [1], [0, 0, 1, 1], [], []>} : vector<2x32xbf16>, vector<32x32xbf16>, vector<2x32xf32> -> vector<2x32xf32>
    %c0_3 = arith.constant 0 : index
    %c0_4 = arith.constant 0 : index
    %3 = vector.load %arg3[%c0_3, %c0_4] : memref<1x32xf32, #tpu.memory_space<vmem>>, vector<1x32xf32>
    %4 = vector.broadcast %3 : vector<1x32xf32> to vector<2x32xf32>
    %5 = arith.addf %2, %4 : vector<2x32xf32>
    %cst_5 = arith.constant 0.000000e+00 : f32
    %6 = vector.broadcast %cst_5 : f32 to vector<2x32xf32>
    %7 = arith.maximumf %5, %6 : vector<2x32xf32>
    %8 = arith.truncf %7 : vector<2x32xf32> to vector<2x32xbf16>
    %c0_6 = arith.constant 0 : index
    %c0_7 = arith.constant 0 : index
    %9 = vector.load %arg4[%c0_6, %c0_7] : memref<32x32xbf16, #tpu.memory_space<vmem>>, vector<32x32xbf16>
    %cst_8 = arith.constant dense<0.000000e+00> : vector<2x32xf32>
    %10 = tpu.matmul %8, %9, %cst_8 {dimension_numbers = #tpu.dot_dimension_numbers<[1], [0], [0], [1], [0, 0, 1, 1], [], []>} : vector<2x32xbf16>, vector<32x32xbf16>, vector<2x32xf32> -> vector<2x32xf32>
    %c0_9 = arith.constant 0 : index
    %c0_10 = arith.constant 0 : index
    %11 = vector.load %arg5[%c0_9, %c0_10] : memref<1x32xf32, #tpu.memory_space<vmem>>, vector<1x32xf32>
    %12 = vector.broadcast %11 : vector<1x32xf32> to vector<2x32xf32>
    %13 = arith.addf %10, %12 : vector<2x32xf32>
    %cst_11 = arith.constant 0.000000e+00 : f32
    %14 = vector.broadcast %cst_11 : f32 to vector<2x32xf32>
    %15 = arith.maximumf %13, %14 : vector<2x32xf32>
    %c0_12 = arith.constant 0 : index
    %c0_13 = arith.constant 0 : index
    %16 = vector.load %arg6[%c0_12, %c0_13] : memref<1x32xf32, #tpu.memory_space<vmem>>, vector<1x32xf32>
    %17 = vector.broadcast %16 : vector<1x32xf32> to vector<2x32xf32>
    %18 = arith.mulf %15, %17 : vector<2x32xf32>
    %cst_14 = arith.constant dense<0.000000e+00> : vector<2xf32>
    %19 = vector.multi_reduction <add>, %18, %cst_14 [1] : vector<2x32xf32> to vector<2xf32>
    %20 = vector.shape_cast %19 : vector<2xf32> to vector<2x1xf32>
    %c0_15 = arith.constant 0 : index
    %c0_16 = arith.constant 0 : index
    %21 = vector.load %arg7[%c0_15, %c0_16] : memref<1x1xf32, #tpu.memory_space<vmem>>, vector<1x1xf32>
    %22 = vector.broadcast %21 : vector<1x1xf32> to vector<2x1xf32>
    %23 = arith.addf %20, %22 : vector<2x1xf32>
    %24 = arith.negf %23 : vector<2x1xf32>
    %25 = math.exp %24 : vector<2x1xf32>
    %cst_17 = arith.constant 1.000000e+00 : f32
    %26 = vector.broadcast %cst_17 : f32 to vector<2x1xf32>
    %27 = arith.addf %26, %25 : vector<2x1xf32>
    %28 = arith.divf %26, %27 : vector<2x1xf32>
    %c0_18 = arith.constant 0 : index
    %c0_19 = arith.constant 0 : index
    %29 = vector.load %arg8[%c0_18, %c0_19] : memref<2x1xf32, #tpu.memory_space<vmem>>, vector<2x1xf32>
    tpu.vector_store %arg8[%c0_18, %c0_19], %28 {strides = array<i32>} : memref<2x1xf32, #tpu.memory_space<vmem>>, vector<2x1xf32>,
    return
  }
  func.func @transform_0(%arg0: i32) -> (i32, i32) {
    %c0_i32 = arith.constant 0 : i32
    %c0_i32_0 = arith.constant 0 : i32
    return %arg0, %c0_i32 : i32, i32
  }
  func.func @transform_1(%arg0: i32) -> (i32, i32) {
    %c0_i32 = arith.constant 0 : i32
    %c0_i32_0 = arith.constant 0 : i32
    %c0_i32_1 = arith.constant 0 : i32
    return %c0_i32, %c0_i32_0 : i32, i32
  }
  func.func @transform_2(%arg0: i32) -> (i32, i32) {
    %c0_i32 = arith.constant 0 : i32
    %c0_i32_0 = arith.constant 0 : i32
    %c0_i32_1 = arith.constant 0 : i32
    return %c0_i32, %c0_i32_0 : i32, i32
  }
  func.func @transform_3(%arg0: i32) -> (i32, i32) {
    %c0_i32 = arith.constant 0 : i32
    %c0_i32_0 = arith.constant 0 : i32
    %c0_i32_1 = arith.constant 0 : i32
    return %c0_i32, %c0_i32_0 : i32, i32
  }
  func.func @transform_4(%arg0: i32) -> (i32, i32) {
    %c0_i32 = arith.constant 0 : i32
    %c0_i32_0 = arith.constant 0 : i32
    %c0_i32_1 = arith.constant 0 : i32
    return %c0_i32, %c0_i32_0 : i32, i32
  }
  func.func @transform_5(%arg0: i32) -> (i32, i32) {
    %c0_i32 = arith.constant 0 : i32
    %c0_i32_0 = arith.constant 0 : i32
    %c0_i32_1 = arith.constant 0 : i32
    return %c0_i32, %c0_i32_0 : i32, i32
  }
  func.func @transform_6(%arg0: i32) -> (i32, i32) {
    %c0_i32 = arith.constant 0 : i32
    %c0_i32_0 = arith.constant 0 : i32
    %c0_i32_1 = arith.constant 0 : i32
    return %c0_i32, %c0_i32_0 : i32, i32
  }
  func.func @transform_7(%arg0: i32) -> (i32, i32) {
    %c0_i32 = arith.constant 0 : i32
    %c0_i32_0 = arith.constant 0 : i32
    return %arg0, %c0_i32 : i32, i32
  }
}

module attributes {stable_mosaic.version = 11 : i64} {
  func.func @_head_kernel(%arg0: i32, %arg1: memref<2x32xbf16, #tpu.memory_space<vmem>>, %arg2: memref<32x32xbf16, #tpu.memory_space<vmem>>, %arg3: memref<1x32xf32, #tpu.memory_space<vmem>>, %arg4: memref<32x32xbf16, #tpu.memory_space<vmem>>, %arg5: memref<1x32xf32, #tpu.memory_space<vmem>>, %arg6: memref<1x32xf32, #tpu.memory_space<vmem>>, %arg7: memref<1x1xf32, #tpu.memory_space<vmem>>, %arg8: memref<2x1xf32, #tpu.memory_space<vmem>>) attributes {dimension_semantics = [#tpu.dimension_semantics<parallel>], iteration_bounds = array<i64: 1>, scalar_prefetch = 0 : i64, scratch_operands = 0 : i64, tpu.core_type = #tpu.core_type<tc>, window_params = [{transform_indices = @transform_0, window_bounds = array<i64: 2, 32>}, {pipeline_mode = #tpu.pipeline_mode<synchronous>, transform_indices = @transform_1, window_bounds = array<i64: 32, 32>}, {pipeline_mode = #tpu.pipeline_mode<synchronous>, transform_indices = @transform_2, window_bounds = array<i64: 1, 32>}, {pipeline_mode = #tpu.pipeline_mode<synchronous>, transform_indices = @transform_3, window_bounds = array<i64: 32, 32>}, {pipeline_mode = #tpu.pipeline_mode<synchronous>, transform_indices = @transform_4, window_bounds = array<i64: 1, 32>}, {pipeline_mode = #tpu.pipeline_mode<synchronous>, transform_indices = @transform_5, window_bounds = array<i64: 1, 32>}, {pipeline_mode = #tpu.pipeline_mode<synchronous>, transform_indices = @transform_6, window_bounds = array<i64: 1, 1>}, {transform_indices = @transform_7, window_bounds = array<i64: 2, 1>}]} {
    %c0 = arith.constant 0 : index
    %c0_0 = arith.constant 0 : index
    %0 = vector.load %arg1[%c0, %c0_0] : memref<2x32xbf16, #tpu.memory_space<vmem>>, vector<2x32xbf16>
    %c0_1 = arith.constant 0 : index
    %c0_2 = arith.constant 0 : index
    %1 = vector.load %arg2[%c0_1, %c0_2] : memref<32x32xbf16, #tpu.memory_space<vmem>>, vector<32x32xbf16>
    %cst = arith.constant dense<0.000000e+00> : vector<2x32xf32>
    %2 = tpu.matmul %0, %1, %cst {dimension_numbers = #tpu.dot_dimension_numbers<[1], [0], [0], [1], [0, 0, 1, 1], [], []>} : vector<2x32xbf16>, vector<32x32xbf16>, vector<2x32xf32> -> vector<2x32xf32>
    %c0_3 = arith.constant 0 : index
    %c0_4 = arith.constant 0 : index
    %3 = vector.load %arg3[%c0_3, %c0_4] : memref<1x32xf32, #tpu.memory_space<vmem>>, vector<1x32xf32>
    %4 = vector.broadcast %3 : vector<1x32xf32> to vector<2x32xf32>
    %5 = arith.addf %2, %4 : vector<2x32xf32>
    %cst_5 = arith.constant 0.000000e+00 : f32
    %6 = vector.broadcast %cst_5 : f32 to vector<2x32xf32>
    %7 = arith.maximumf %5, %6 : vector<2x32xf32>
    %8 = arith.truncf %7 : vector<2x32xf32> to vector<2x32xbf16>
    %c0_6 = arith.constant 0 : index
    %c0_7 = arith.constant 0 : index
    %9 = vector.load %arg4[%c0_6, %c0_7] : memref<32x32xbf16, #tpu.memory_space<vmem>>, vector<32x32xbf16>
    %cst_8 = arith.constant dense<0.000000e+00> : vector<2x32xf32>
    %10 = tpu.matmul %8, %9, %cst_8 {dimension_numbers = #tpu.dot_dimension_numbers<[1], [0], [0], [1], [0, 0, 1, 1], [], []>} : vector<2x32xbf16>, vector<32x32xbf16>, vector<2x32xf32> -> vector<2x32xf32>
    %c0_9 = arith.constant 0 : index
    %c0_10 = arith.constant 0 : index
    %11 = vector.load %arg5[%c0_9, %c0_10] : memref<1x32xf32, #tpu.memory_space<vmem>>, vector<1x32xf32>
    %12 = vector.broadcast %11 : vector<1x32xf32> to vector<2x32xf32>
    %13 = arith.addf %10, %12 : vector<2x32xf32>
    %cst_11 = arith.constant 0.000000e+00 : f32
    %14 = vector.broadcast %cst_11 : f32 to vector<2x32xf32>
    %15 = arith.maximumf %13, %14 : vector<2x32xf32>
    %c0_12 = arith.constant 0 : index
    %c0_13 = arith.constant 0 : index
    %16 = vector.load %arg6[%c0_12, %c0_13] : memref<1x32xf32, #tpu.memory_space<vmem>>, vector<1x32xf32>
    %17 = vector.broadcast %16 : vector<1x32xf32> to vector<2x32xf32>
    %18 = arith.mulf %15, %17 : vector<2x32xf32>
    %cst_14 = arith.constant dense<0.000000e+00> : vector<2xf32>
    %19 = vector.multi_reduction <add>, %18, %cst_14 [1] : vector<2x32xf32> to vector<2xf32>
    %20 = vector.shape_cast %19 : vector<2xf32> to vector<2x1xf32>
    %c0_15 = arith.constant 0 : index
    %c0_16 = arith.constant 0 : index
    %21 = vector.load %arg7[%c0_15, %c0_16] : memref<1x1xf32, #tpu.memory_space<vmem>>, vector<1x1xf32>
    %22 = vector.broadcast %21 : vector<1x1xf32> to vector<2x1xf32>
    %23 = arith.addf %20, %22 : vector<2x1xf32>
    %24 = arith.negf %23 : vector<2x1xf32>
    %25 = math.exp %24 : vector<2x1xf32>
    %cst_17 = arith.constant 1.000000e+00 : f32
    %26 = vector.broadcast %cst_17 : f32 to vector<2x1xf32>
    %27 = arith.addf %26, %25 : vector<2x1xf32>
    %28 = arith.divf %26, %27 : vector<2x1xf32>
    %c0_18 = arith.constant 0 : index
    %c0_19 = arith.constant 0 : index
    %29 = vector.load %arg8[%c0_18, %c0_19] : memref<2x1xf32, #tpu.memory_space<vmem>>, vector<2x1xf32>
    tpu.vector_store %arg8[%c0_18, %c0_19], %28 {strides = array<i32>} : memref<2x1xf32, #tpu.memory_space<vmem>>, vector<2x1xf32>,
    return
  }
  func.func @transform_0(%arg0: i32) -> (i32, i32) {
    %c0_i32 = arith.constant 0 : i32
    %c0_i32_0 = arith.constant 0 : i32
    return %arg0, %c0_i32 : i32, i32
  }
  func.func @transform_1(%arg0: i32) -> (i32, i32) {
    %c0_i32 = arith.constant 0 : i32
    %c0_i32_0 = arith.constant 0 : i32
    %c0_i32_1 = arith.constant 0 : i32
    return %c0_i32, %c0_i32_0 : i32, i32
  }
  func.func @transform_2(%arg0: i32) -> (i32, i32) {
    %c0_i32 = arith.constant 0 : i32
    %c0_i32_0 = arith.constant 0 : i32
    %c0_i32_1 = arith.constant 0 : i32
    return %c0_i32, %c0_i32_0 : i32, i32
  }
  func.func @transform_3(%arg0: i32) -> (i32, i32) {
    %c0_i32 = arith.constant 0 : i32
    %c0_i32_0 = arith.constant 0 : i32
    %c0_i32_1 = arith.constant 0 : i32
    return %c0_i32, %c0_i32_0 : i32, i32
  }
  func.func @transform_4(%arg0: i32) -> (i32, i32) {
    %c0_i32 = arith.constant 0 : i32
    %c0_i32_0 = arith.constant 0 : i32
    %c0_i32_1 = arith.constant 0 : i32
    return %c0_i32, %c0_i32_0 : i32, i32
  }
  func.func @transform_5(%arg0: i32) -> (i32, i32) {
    %c0_i32 = arith.constant 0 : i32
    %c0_i32_0 = arith.constant 0 : i32
    %c0_i32_1 = arith.constant 0 : i32
    return %c0_i32, %c0_i32_0 : i32, i32
  }
  func.func @transform_6(%arg0: i32) -> (i32, i32) {
    %c0_i32 = arith.constant 0 : i32
    %c0_i32_0 = arith.constant 0 : i32
    %c0_i32_1 = arith.constant 0 : i32
    return %c0_i32, %c0_i32_0 : i32, i32
  }
  func.func @transform_7(%arg0: i32) -> (i32, i32) {
    %c0_i32 = arith.constant 0 : i32
    %c0_i32_0 = arith.constant 0 : i32
    return %arg0, %c0_i32 : i32, i32
  }
}

</mosaic_0001>

<llo_original>
// kernel: _model_forward_impl.1
$region0: #{_model_forward_impl.1}
  #allocation0 [shape = 'u32[]', space=smem, size = 0x4, offset = 0x4, fixed_abs, tag = 'smem constant byte address 0x4 - core index']
  #allocation1 [shape = 'u32[144,128]{1,0:T(1,128)}', space=vmem, size = 0x12000, scoped, tag = 'internal scratch']
  #allocation2 [shape = 'f32[1,1]{1,0:T(1,128)S(1)}', space=vmem, size = 0x200, scoped, tag = 'scoped memory for _model_forward_impl.1']
  %s0 = inlined_call_operand.vmem [shape: bf16[2,32], index: 0, kind: input, shape index: {}]
  %s1 = inlined_call_operand.vmem [shape: bf16[32,32], index: 1, kind: input, shape index: {}]
  %s2 = inlined_call_operand.vmem [shape: f32[1,32], index: 2, kind: input, shape index: {}]
  %s3 = inlined_call_operand.vmem [shape: bf16[32,32], index: 3, kind: input, shape index: {}]
  %s4 = inlined_call_operand.vmem [shape: f32[1,32], index: 4, kind: input, shape index: {}]
  %s5 = inlined_call_operand.vmem [shape: f32[1,32], index: 5, kind: input, shape index: {}]
  %s6 = inlined_call_operand.<no memory space> [shape: f32[1,1], index: 6, kind: input, shape index: {}]
  %s7 = inlined_call_operand.vmem [shape: f32[2,1], index: 7, kind: output, shape index: {}]
  %s8 = sld [smem:[#allocation0]]
  $region38: #{_model_forward_impl.1} parent=0
    _
  %s10 = ssub.s32 1, %s8
  %s11 = scalar_select 0, %s10, %s8
  %v12 = vstv %s6
  %13 = vst [vmem:[#allocation2] sm:$0x1] %v12
  // Predicated region
  $region2: #{_model_forward_impl.1} parent=0 // pred_check
    _
  $region3: #{_model_forward_impl.1} parent=0 // pred_check_branch
    %15 = sbr.rel (0) target = $region5
  $region4: #{_model_forward_impl.1} parent=0 // pred_region
    _
  $region5: #{_model_forward_impl.1} parent=0 // pred_fallthru
    _
  // Predicated region
  $region6: #{_model_forward_impl.1} parent=0 // pred_check
    _
  $region7: #{_model_forward_impl.1} parent=0 // pred_check_branch
    %17 = sbr.rel (0) target = $region9
  $region8: #{_model_forward_impl.1} parent=0 // pred_region
    _
  $region9: #{_model_forward_impl.1} parent=0 // pred_fallthru
    _
  // Predicated region
  $region10: #{_model_forward_impl.1} parent=0 // pred_check
    _
  $region11: #{_model_forward_impl.1} parent=0 // pred_check_branch
    %19 = sbr.rel (0) target = $region13
  $region12: #{_model_forward_impl.1} parent=0 // pred_region
    _
  $region13: #{_model_forward_impl.1} parent=0 // pred_fallthru
    _
  // Predicated region
  $region14: #{_model_forward_impl.1} parent=0 // pred_check
    _
  $region15: #{_model_forward_impl.1} parent=0 // pred_check_branch
    %21 = sbr.rel (0) target = $region17
  $region16: #{_model_forward_impl.1} parent=0 // pred_region
    _
  $region17: #{_model_forward_impl.1} parent=0 // pred_fallthru
    _
  // Predicated region
  $region18: #{_model_forward_impl.1} parent=0 // pred_check
    _
  $region19: #{_model_forward_impl.1} parent=0 // pred_check_branch
    %23 = sbr.rel (0) target = $region21
  $region20: #{_model_forward_impl.1} parent=0 // pred_region
    _
  $region21: #{_model_forward_impl.1} parent=0 // pred_fallthru
    _
  // Predicated region
  $region22: #{_model_forward_impl.1} parent=0 // pred_check
    _
  $region23: #{_model_forward_impl.1} parent=0 // pred_check_branch
    %25 = sbr.rel (0) target = $region25
  $region24: #{_model_forward_impl.1} parent=0 // pred_region
    _
  $region25: #{_model_forward_impl.1} parent=0 // pred_fallthru
    _
  // Predicated region
  $region26: #{_model_forward_impl.1} parent=0 // pred_check
    _
  $region27: #{_model_forward_impl.1} parent=0 // pred_check_branch
    %27 = sbr.rel (0) target = $region29
  $region28: #{_model_forward_impl.1} parent=0 // pred_region
    _
  $region29: #{_model_forward_impl.1} parent=0 // pred_fallthru
    _
  %v29 = vld [vmem:[%s0] sm:$0x1]
  %v30 = vld [vmem:[%s1] sm:$0xf]
  %v31 = vld [vmem:[%s1 + $0x4] sm:$0xf]
  %v32 = vld [vmem:[%s1 + $0x8] sm:$0xf]
  %v33 = vld [vmem:[%s1 + $0xc] sm:$0xf]
  %v34 = vld [vmem:[%s2] sm:$0x1]
  %v36 = vlaneseq
  %v37 = vshrl.u32 %v36, 7
  %v38 = vsub.s32 0, %v37
  %v39 = vrot.slane %v34, %v38
  %v45 = vunpack.c.l.b16 %v30
  %v46 = vunpack.c.l.b16 %v31
  %v47 = vunpack.c.l.b16 %v32
  %v48 = vunpack.c.l.b16 %v33
  %v49 = vpack.c.b16 %v46, %v45
  %v50 = vpack.c.b16 %v48, %v47
  %vm53 = vcmask 261120
  %v55 = vsel %vm53, %v29, 0
  %57 = vmatprep.subr.bf16.mxu0 0
  %58 = vmatpush1.bf16.msra.mxu0 %v49
  %59 = vmatprep.subr.bf16.mxu0 0
  %60 = vmatpush1.bf16.msra.mxu0 %v50
  %61 = vmatprep.subr.bf16.mxu0 0
  %62 = vmatpush1.bf16.msra.mxu0 0
  %63 = vmatprep.subr.bf16.mxu0 0
  %64 = vmatpush1.bf16.msra.mxu0 0
  %65 = vmatprep.subr.bf16.mxu0 0
  %66 = vmatpush1.bf16.msra.mxu0 0
  %67 = vmatprep.subr.bf16.mxu0 0
  %68 = vmatpush1.bf16.msra.mxu0 0
  %69 = vmatprep.subr.bf16.mxu0 0
  %70 = vmatpush1.bf16.msra.mxu0 0
  %71 = vmatprep.subr.bf16.mxu0 0
  %72 = vmatpush1.bf16.msra.mxu0 0
  %73 = vmatprep.subr.bf16.mxu0 0
  %74 = vmatpush1.bf16.msra.mxu0 0
  %75 = vmatprep.subr.bf16.mxu0 0
  %76 = vmatpush1.bf16.msra.mxu0 0
  %77 = vmatprep.subr.bf16.mxu0 0
  %78 = vmatpush1.bf16.msra.mxu0 0
  %79 = vmatprep.subr.bf16.mxu0 0
  %80 = vmatpush1.bf16.msra.mxu0 0
  %81 = vmatprep.subr.bf16.mxu0 0
  %82 = vmatpush1.bf16.msra.mxu0 0
  %83 = vmatprep.subr.bf16.mxu0 0
  %84 = vmatpush1.bf16.msra.mxu0 0
  %85 = vmatprep.subr.bf16.mxu0 0
  %86 = vmatpush1.bf16.msra.mxu0 0
  %87 = vmatprep.subr.bf16.mxu0 0
  %88 = vmatpush1.bf16.msra.mxu0 0
  %89 = vmatprep.mubr.bf16.mxu0 0
  %90 = vmatmul.mubr.bf16.gmra.mrb[0].mxu0 %v55
  %v91 = vpop.f32.mrb[0].mxu0
  %v92 = vadd.f32 %v39, %v91
  %v93 = vpop.f32.mrb[0].mxu0
  %v94 = vpop.f32.mrb[0].mxu0
  %v95 = vpop.f32.mrb[0].mxu0
  %96 = vdwg.mxu0
  %v97 = vmax.f32 %v92, 0.0
  %v98 = vpack.c.bf16 %v97, %v97
  %v99 = vld [vmem:[%s3] sm:$0xf]
  %v100 = vld [vmem:[%s3 + $0x4] sm:$0xf]
  %v101 = vld [vmem:[%s3 + $0x8] sm:$0xf]
  %v102 = vld [vmem:[%s3 + $0xc] sm:$0xf]
  %v103 = vld [vmem:[%s4] sm:$0x1]
  %v105 = vlaneseq
  %v106 = vshrl.u32 %v105, 7
  %v107 = vsub.s32 0, %v106
  %v108 = vrot.slane %v103, %v107
  %v114 = vunpack.c.l.b16 %v99
  %v115 = vunpack.c.l.b16 %v100
  %v116 = vunpack.c.l.b16 %v101
  %v117 = vunpack.c.l.b16 %v102
  %v118 = vpack.c.b16 %v115, %v114
  %v119 = vpack.c.b16 %v117, %v116
  %v123 = vsel %vm53, %v98, 0
  %125 = vmatprep.subr.bf16.mxu0 0
  %126 = vmatpush1.bf16.msra.mxu0 %v118
  %127 = vmatprep.subr.bf16.mxu0 0
  %128 = vmatpush1.bf16.msra.mxu0 %v119
  %129 = vmatprep.subr.bf16.mxu0 0
  %130 = vmatpush1.bf16.msra.mxu0 0
  %131 = vmatprep.subr.bf16.mxu0 0
  %132 = vmatpush1.bf16.msra.mxu0 0
  %133 = vmatprep.subr.bf16.mxu0 0
  %134 = vmatpush1.bf16.msra.mxu0 0
  %135 = vmatprep.subr.bf16.mxu0 0
  %136 = vmatpush1.bf16.msra.mxu0 0
  %137 = vmatprep.subr.bf16.mxu0 0
  %138 = vmatpush1.bf16.msra.mxu0 0
  %139 = vmatprep.subr.bf16.mxu0 0
  %140 = vmatpush1.bf16.msra.mxu0 0
  %141 = vmatprep.subr.bf16.mxu0 0
  %142 = vmatpush1.bf16.msra.mxu0 0
  %143 = vmatprep.subr.bf16.mxu0 0
  %144 = vmatpush1.bf16.msra.mxu0 0
  %145 = vmatprep.subr.bf16.mxu0 0
  %146 = vmatpush1.bf16.msra.mxu0 0
  %147 = vmatprep.subr.bf16.mxu0 0
  %148 = vmatpush1.bf16.msra.mxu0 0
  %149 = vmatprep.subr.bf16.mxu0 0
  %150 = vmatpush1.bf16.msra.mxu0 0
  %151 = vmatprep.subr.bf16.mxu0 0
  %152 = vmatpush1.bf16.msra.mxu0 0
  %153 = vmatprep.subr.bf16.mxu0 0
  %154 = vmatpush1.bf16.msra.mxu0 0
  %155 = vmatprep.subr.bf16.mxu0 0
  %156 = vmatpush1.bf16.msra.mxu0 0
  %157 = vmatprep.mubr.bf16.mxu0 0
  %158 = vmatmul.mubr.bf16.gmra.mrb[0].mxu0 %v123
  %v159 = vpop.f32.mrb[0].mxu0
  %v160 = vadd.f32 %v108, %v159
  %v161 = vpop.f32.mrb[0].mxu0
  %v162 = vpop.f32.mrb[0].mxu0
  %v163 = vpop.f32.mrb[0].mxu0
  %164 = vdwg.mxu0
  %v165 = vmax.f32 %v160, 0.0
  %v166 = vld [vmem:[%s5] sm:$0x1]
  %v168 = vlaneseq
  %v169 = vshrl.u32 %v168, 7
  %v170 = vsub.s32 0, %v169
  %v171 = vrot.slane %v166, %v170
  %v173 = vmul.f32 %v165, %v171
  %vm174 = vcmask 254976
  %v175 = vsel %vm174, %v173, 0.0
  %176 = vadd.xlane.f32.xlu0 %v175
  %v177 = vpop.xlane.xlu0 %176
  %v178 = vld [vmem:[#allocation2] sm:$0x1]
  %v180 = vlaneseq
  %v181 = vshrl.u32 %v180, 7
  %v182 = vsub.s32 0, %v181
  %v183 = vrot.slane %v178, %v182
  %v185 = vadd.f32 %v177, %v183
  %v186 = vxor.u32 %v185, 2147483648
  %v187 = vmul.f32 %v186, 1.442695
  %v188 = vpow.pop %v187
  %v189 = vadd.f32 %v188, 1.0
  %v190 = vrcp.pop %v189
  %v191 = vmul.f32 1.0, %v190
  %vm192 = vcmask 1024
  %193 = vst.msk [vmem:[%s7] sm:$0x3] %vm192, %v191
  // Predicated region
  $region30: #{_model_forward_impl.1} parent=0 // pred_check
    _
  $region31: #{_model_forward_impl.1} parent=0 // pred_check_branch
    %195 = sbr.rel (0) target = $region33
  $region32: #{_model_forward_impl.1} parent=0 // pred_region
    _
  $region33: #{_model_forward_impl.1} parent=0 // pred_fallthru
    _
  // Predicated region
  $region34: #{_model_forward_impl.1} parent=0 // pred_check
    _
  $region35: #{_model_forward_impl.1} parent=0 // pred_check_branch
    %197 = sbr.rel (0) target = $region37
  $region36: #{_model_forward_impl.1} parent=0 // pred_region
    _
  $region37: #{_model_forward_impl.1} parent=0 // pred_fallthru
    _

// kernel: _model_forward_impl.1
$region0: #{_model_forward_impl.1}
  #allocation0 [shape = 'u32[]', space=smem, size = 0x4, offset = 0x4, fixed_abs, tag = 'smem constant byte address 0x4 - core index']
  #allocation1 [shape = 'u32[144,128]{1,0:T(1,128)}', space=vmem, size = 0x12000, scoped, tag = 'internal scratch']
  #allocation2 [shape = 'f32[1,1]{1,0:T(1,128)S(1)}', space=vmem, size = 0x200, scoped, tag = 'scoped memory for _model_forward_impl.1']
  %s0 = inlined_call_operand.vmem [shape: bf16[2,32], index: 0, kind: input, shape index: {}]
  %s1 = inlined_call_operand.vmem [shape: bf16[32,32], index: 1, kind: input, shape index: {}]
  %s2 = inlined_call_operand.vmem [shape: f32[1,32], index: 2, kind: input, shape index: {}]
  %s3 = inlined_call_operand.vmem [shape: bf16[32,32], index: 3, kind: input, shape index: {}]
  %s4 = inlined_call_operand.vmem [shape: f32[1,32], index: 4, kind: input, shape index: {}]
  %s5 = inlined_call_operand.vmem [shape: f32[1,32], index: 5, kind: input, shape index: {}]
  %s6 = inlined_call_operand.<no memory space> [shape: f32[1,1], index: 6, kind: input, shape index: {}]
  %s7 = inlined_call_operand.vmem [shape: f32[2,1], index: 7, kind: output, shape index: {}]
  %s8 = sld [smem:[#allocation0]]
  $region38: #{_model_forward_impl.1} parent=0
    _
  %s10 = ssub.s32 1, %s8
  %s11 = scalar_select 0, %s10, %s8
  %v12 = vstv %s6
  %13 = vst [vmem:[#allocation2] sm:$0x1] %v12
  // Predicated region
  $region2: #{_model_forward_impl.1} parent=0 // pred_check
    _
  $region3: #{_model_forward_impl.1} parent=0 // pred_check_branch
    %15 = sbr.rel (0) target = $region5
  $region4: #{_model_forward_impl.1} parent=0 // pred_region
    _
  $region5: #{_model_forward_impl.1} parent=0 // pred_fallthru
    _
  // Predicated region
  $region6: #{_model_forward_impl.1} parent=0 // pred_check
    _
  $region7: #{_model_forward_impl.1} parent=0 // pred_check_branch
    %17 = sbr.rel (0) target = $region9
  $region8: #{_model_forward_impl.1} parent=0 // pred_region
    _
  $region9: #{_model_forward_impl.1} parent=0 // pred_fallthru
    _
  // Predicated region
  $region10: #{_model_forward_impl.1} parent=0 // pred_check
    _
  $region11: #{_model_forward_impl.1} parent=0 // pred_check_branch
    %19 = sbr.rel (0) target = $region13
  $region12: #{_model_forward_impl.1} parent=0 // pred_region
    _
  $region13: #{_model_forward_impl.1} parent=0 // pred_fallthru
    _
  // Predicated region
  $region14: #{_model_forward_impl.1} parent=0 // pred_check
    _
  $region15: #{_model_forward_impl.1} parent=0 // pred_check_branch
    %21 = sbr.rel (0) target = $region17
  $region16: #{_model_forward_impl.1} parent=0 // pred_region
    _
  $region17: #{_model_forward_impl.1} parent=0 // pred_fallthru
    _
  // Predicated region
  $region18: #{_model_forward_impl.1} parent=0 // pred_check
    _
  $region19: #{_model_forward_impl.1} parent=0 // pred_check_branch
    %23 = sbr.rel (0) target = $region21
  $region20: #{_model_forward_impl.1} parent=0 // pred_region
    _
  $region21: #{_model_forward_impl.1} parent=0 // pred_fallthru
    _
  // Predicated region
  $region22: #{_model_forward_impl.1} parent=0 // pred_check
    _
  $region23: #{_model_forward_impl.1} parent=0 // pred_check_branch
    %25 = sbr.rel (0) target = $region25
  $region24: #{_model_forward_impl.1} parent=0 // pred_region
    _
  $region25: #{_model_forward_impl.1} parent=0 // pred_fallthru
    _
  // Predicated region
  $region26: #{_model_forward_impl.1} parent=0 // pred_check
    _
  $region27: #{_model_forward_impl.1} parent=0 // pred_check_branch
    %27 = sbr.rel (0) target = $region29
  $region28: #{_model_forward_impl.1} parent=0 // pred_region
    _
  $region29: #{_model_forward_impl.1} parent=0 // pred_fallthru
    _
  %v29 = vld [vmem:[%s0] sm:$0x1]
  %v30 = vld [vmem:[%s1] sm:$0xf]
  %v31 = vld [vmem:[%s1 + $0x4] sm:$0xf]
  %v32 = vld [vmem:[%s1 + $0x8] sm:$0xf]
  %v33 = vld [vmem:[%s1 + $0xc] sm:$0xf]
  %v34 = vld [vmem:[%s2] sm:$0x1]
  %v36 = vlaneseq
  %v37 = vshrl.u32 %v36, 7
  %v38 = vsub.s32 0, %v37
  %v39 = vrot.slane %v34, %v38
  %v45 = vunpack.c.l.b16 %v30
  %v46 = vunpack.c.l.b16 %v31
  %v47 = vunpack.c.l.b16 %v32
  %v48 = vunpack.c.l.b16 %v33
  %v49 = vpack.c.b16 %v46, %v45
  %v50 = vpack.c.b16 %v48, %v47
  %vm53 = vcmask 261120
  %v55 = vsel %vm53, %v29, 0
  %57 = vmatprep.subr.bf16.mxu0 0
  %58 = vmatpush1.bf16.msra.mxu0 %v49
  %59 = vmatprep.subr.bf16.mxu0 0
  %60 = vmatpush1.bf16.msra.mxu0 %v50
  %61 = vmatprep.subr.bf16.mxu0 0
  %62 = vmatpush1.bf16.msra.mxu0 0
  %63 = vmatprep.subr.bf16.mxu0 0
  %64 = vmatpush1.bf16.msra.mxu0 0
  %65 = vmatprep.subr.bf16.mxu0 0
  %66 = vmatpush1.bf16.msra.mxu0 0
  %67 = vmatprep.subr.bf16.mxu0 0
  %68 = vmatpush1.bf16.msra.mxu0 0
  %69 = vmatprep.subr.bf16.mxu0 0
  %70 = vmatpush1.bf16.msra.mxu0 0
  %71 = vmatprep.subr.bf16.mxu0 0
  %72 = vmatpush1.bf16.msra.mxu0 0
  %73 = vmatprep.subr.bf16.mxu0 0
  %74 = vmatpush1.bf16.msra.mxu0 0
  %75 = vmatprep.subr.bf16.mxu0 0
  %76 = vmatpush1.bf16.msra.mxu0 0
  %77 = vmatprep.subr.bf16.mxu0 0
  %78 = vmatpush1.bf16.msra.mxu0 0
  %79 = vmatprep.subr.bf16.mxu0 0
  %80 = vmatpush1.bf16.msra.mxu0 0
  %81 = vmatprep.subr.bf16.mxu0 0
  %82 = vmatpush1.bf16.msra.mxu0 0
  %83 = vmatprep.subr.bf16.mxu0 0
  %84 = vmatpush1.bf16.msra.mxu0 0
  %85 = vmatprep.subr.bf16.mxu0 0
  %86 = vmatpush1.bf16.msra.mxu0 0
  %87 = vmatprep.subr.bf16.mxu0 0
  %88 = vmatpush1.bf16.msra.mxu0 0
  %89 = vmatprep.mubr.bf16.mxu0 0
  %90 = vmatmul.mubr.bf16.gmra.mrb[0].mxu0 %v55
  %v91 = vpop.f32.mrb[0].mxu0
  %v92 = vadd.f32 %v39, %v91
  %v93 = vpop.f32.mrb[0].mxu0
  %v94 = vpop.f32.mrb[0].mxu0
  %v95 = vpop.f32.mrb[0].mxu0
  %96 = vdwg.mxu0
  %v97 = vmax.f32 %v92, 0.0
  %v98 = vpack.c.bf16 %v97, %v97
  %v99 = vld [vmem:[%s3] sm:$0xf]
  %v100 = vld [vmem:[%s3 + $0x4] sm:$0xf]
  %v101 = vld [vmem:[%s3 + $0x8] sm:$0xf]
  %v102 = vld [vmem:[%s3 + $0xc] sm:$0xf]
  %v103 = vld [vmem:[%s4] sm:$0x1]
  %v105 = vlaneseq
  %v106 = vshrl.u32 %v105, 7
  %v107 = vsub.s32 0, %v106
  %v108 = vrot.slane %v103, %v107
  %v114 = vunpack.c.l.b16 %v99
  %v115 = vunpack.c.l.b16 %v100
  %v116 = vunpack.c.l.b16 %v101
  %v117 = vunpack.c.l.b16 %v102
  %v118 = vpack.c.b16 %v115, %v114
  %v119 = vpack.c.b16 %v117, %v116
  %v123 = vsel %vm53, %v98, 0
  %125 = vmatprep.subr.bf16.mxu0 0
  %126 = vmatpush1.bf16.msra.mxu0 %v118
  %127 = vmatprep.subr.bf16.mxu0 0
  %128 = vmatpush1.bf16.msra.mxu0 %v119
  %129 = vmatprep.subr.bf16.mxu0 0
  %130 = vmatpush1.bf16.msra.mxu0 0
  %131 = vmatprep.subr.bf16.mxu0 0
  %132 = vmatpush1.bf16.msra.mxu0 0
  %133 = vmatprep.subr.bf16.mxu0 0
  %134 = vmatpush1.bf16.msra.mxu0 0
  %135 = vmatprep.subr.bf16.mxu0 0
  %136 = vmatpush1.bf16.msra.mxu0 0
  %137 = vmatprep.subr.bf16.mxu0 0
  %138 = vmatpush1.bf16.msra.mxu0 0
  %139 = vmatprep.subr.bf16.mxu0 0
  %140 = vmatpush1.bf16.msra.mxu0 0
  %141 = vmatprep.subr.bf16.mxu0 0
  %142 = vmatpush1.bf16.msra.mxu0 0
  %143 = vmatprep.subr.bf16.mxu0 0
  %144 = vmatpush1.bf16.msra.mxu0 0
  %145 = vmatprep.subr.bf16.mxu0 0
  %146 = vmatpush1.bf16.msra.mxu0 0
  %147 = vmatprep.subr.bf16.mxu0 0
  %148 = vmatpush1.bf16.msra.mxu0 0
  %149 = vmatprep.subr.bf16.mxu0 0
  %150 = vmatpush1.bf16.msra.mxu0 0
  %151 = vmatprep.subr.bf16.mxu0 0
  %152 = vmatpush1.bf16.msra.mxu0 0
  %153 = vmatprep.subr.bf16.mxu0 0
  %154 = vmatpush1.bf16.msra.mxu0 0
  %155 = vmatprep.subr.bf16.mxu0 0
  %156 = vmatpush1.bf16.msra.mxu0 0
  %157 = vmatprep.mubr.bf16.mxu0 0
  %158 = vmatmul.mubr.bf16.gmra.mrb[0].mxu0 %v123
  %v159 = vpop.f32.mrb[0].mxu0
  %v160 = vadd.f32 %v108, %v159
  %v161 = vpop.f32.mrb[0].mxu0
  %v162 = vpop.f32.mrb[0].mxu0
  %v163 = vpop.f32.mrb[0].mxu0
  %164 = vdwg.mxu0
  %v165 = vmax.f32 %v160, 0.0
  %v166 = vld [vmem:[%s5] sm:$0x1]
  %v168 = vlaneseq
  %v169 = vshrl.u32 %v168, 7
  %v170 = vsub.s32 0, %v169
  %v171 = vrot.slane %v166, %v170
  %v173 = vmul.f32 %v165, %v171
  %vm174 = vcmask 254976
  %v175 = vsel %vm174, %v173, 0.0
  %176 = vadd.xlane.f32.xlu0 %v175
  %v177 = vpop.xlane.xlu0 %176
  %v178 = vld [vmem:[#allocation2] sm:$0x1]
  %v180 = vlaneseq
  %v181 = vshrl.u32 %v180, 7
  %v182 = vsub.s32 0, %v181
  %v183 = vrot.slane %v178, %v182
  %v185 = vadd.f32 %v177, %v183
  %v186 = vxor.u32 %v185, 2147483648
  %v187 = vmul.f32 %v186, 1.442695
  %v188 = vpow.pop %v187
  %v189 = vadd.f32 %v188, 1.0
  %v190 = vrcp.pop %v189
  %v191 = vmul.f32 1.0, %v190
  %vm192 = vcmask 1024
  %193 = vst.msk [vmem:[%s7] sm:$0x3] %vm192, %v191
  // Predicated region
  $region30: #{_model_forward_impl.1} parent=0 // pred_check
    _
  $region31: #{_model_forward_impl.1} parent=0 // pred_check_branch
    %195 = sbr.rel (0) target = $region33
  $region32: #{_model_forward_impl.1} parent=0 // pred_region
    _
  $region33: #{_model_forward_impl.1} parent=0 // pred_fallthru
    _
  // Predicated region
  $region34: #{_model_forward_impl.1} parent=0 // pred_check
    _
  $region35: #{_model_forward_impl.1} parent=0 // pred_check_branch
    %197 = sbr.rel (0) target = $region37
  $region36: #{_model_forward_impl.1} parent=0 // pred_region
    _
  $region37: #{_model_forward_impl.1} parent=0 // pred_fallthru
    _

</llo_original>
